<compile_context>
chip_gen: v7x
topology: tpu7x:2x2x1
jax: 0.10.0
libtpu: 0.0.40
codegen_flags: <defaults>
</compile_context>

<pallas_src>
import functools

import jax
import jax.numpy as jnp
from jax.experimental import pallas as pl
from jax.experimental.pallas import tpu as pltpu


def _round_up(x, m):
    return (x + m - 1) // m * m


# --------------------------------------------------------------------------
# Kernel: one batch tile, all weights resident in VMEM.
# --------------------------------------------------------------------------
def dueling_kernel(x_ref, w1_ref, b1_ref, w2_ref, b2_ref, wh_ref, bh_ref,
                   head_ref):
    wdt = w1_ref.dtype                       # MXU operand dtype (f32 or bf16)

    x = x_ref[...].astype(wdt)               # [TB, F_pad]

    # fc1 + relu   (bias add / relu stay in f32: friendly on v5e VPU too)
    h1 = jnp.dot(x, w1_ref[...], preferred_element_type=jnp.float32)
    h1 = jnp.maximum(h1 + b1_ref[...], 0.0).astype(wdt)        # [TB, H_pad]

    # fc2 + relu
    h2 = jnp.dot(h1, w2_ref[...], preferred_element_type=jnp.float32)
    h2 = jnp.maximum(h2 + b2_ref[...], 0.0).astype(wdt)        # [TB, H_pad]

    # fused value|advantage head: col 0 = value, cols 1..A = advantage.
    head = jnp.dot(h2, wh_ref[...], preferred_element_type=jnp.float32)
    head = head + bh_ref[...]                                  # [TB, head_pad]

    head_ref[...] = head.astype(head_ref.dtype)                # lane-dense store


# --------------------------------------------------------------------------
# Host-side parameter prep: fuse heads, zero-pad to hardware tiles.
# --------------------------------------------------------------------------
def prepare_params(params, *, weights_dtype=jnp.float32):
    """Fuse wv|wa into one head; pad F to 8 sublanes, H / head width to 128 lanes."""
    w1, b1 = params["w1"], params["b1"]        # [F, H], [1, H]
    w2, b2 = params["w2"], params["b2"]        # [H, H], [1, H]
    wv, bv = params["wv"], params["bv"]        # [H, 1], [1, 1]
    wa, ba = params["wa"], params["ba"]        # [H, A], [1, A]

    n_features, hidden = w1.shape
    # Sublane-align the fc1 K dim.  For big flattened observations prefer a
    # multiple of 128 so the x tile is also lane-dense.
    f_pad = _round_up(n_features, 8 if n_features <= 128 else 128)
    h_pad = _round_up(hidden, 128)

    wh = jnp.concatenate([wv, wa], axis=1)     # [H, 1+A]
    bh = jnp.concatenate([bv, ba], axis=1)     # [1, 1+A]
    head_pad = _round_up(wh.shape[1], 128)

    def pad_to(a, shape):
        return jnp.pad(a, [(0, s - d) for d, s in zip(a.shape, shape)])

    return dict(
        # weights in MXU dtype (bf16 recommended on all generations), biases f32
        w1=pad_to(w1, (f_pad, h_pad)).astype(weights_dtype),
        b1=pad_to(b1, (1, h_pad)).astype(jnp.float32),
        w2=pad_to(w2, (h_pad, h_pad)).astype(weights_dtype),
        b2=pad_to(b2, (1, h_pad)).astype(jnp.float32),
        wh=pad_to(wh, (h_pad, head_pad)).astype(weights_dtype),
        bh=pad_to(bh, (1, head_pad)).astype(jnp.float32),
    )


def _resident_spec(shape):
    """Constant-index (weight/bias) BlockSpec, single-buffered when supported.

    The block index never changes across the grid, so double-buffering is pure
    VMEM waste.  Fall back to the default (double-buffered) spec on jax
    versions without `pipeline_mode`.
    """
    index_map = lambda i: (0, 0)
    try:
        return pl.BlockSpec(shape, index_map, pipeline_mode=pl.Buffered(1))
    except Exception:
        return pl.BlockSpec(shape, index_map)


# --------------------------------------------------------------------------
# Wrapper: batch-tiled pallas_call + global-mean combine (tiny XLA ops).
# --------------------------------------------------------------------------
@functools.partial(jax.jit, static_argnames=("n_actions", "tile_b", "out_dtype"))
def dueling_forward(x, prepared, *, n_actions, tile_b=256, out_dtype=jnp.float32):
    """x: [B, n_features] float32.  prepared: output of prepare_params."""
    B, F = x.shape
    f_pad, h_pad = prepared["w1"].shape
    head_pad = prepared["wh"].shape[1]

    # Tile choice: 256 fills a v6e/v7x MXU pass (128 already fills v5e's);
    # for small batches pick tile_b so the grid has >= 2 steps, letting the
    # "parallel" axis shard across both v7x TensorCores.
    tile_b = min(tile_b, max(8, _round_up((B + 1) // 2, 8)))
    b_pad = _round_up(B, tile_b)
    if b_pad != B or f_pad != F:
        x = jnp.pad(x, ((0, b_pad - B), (0, f_pad - F)))
    grid = (pl.cdiv(b_pad, tile_b),)

    # --- VMEM budget (weights single-buffered, x/out double-buffered) -------
    w_bytes = jnp.dtype(prepared["w1"].dtype).itemsize
    out_bytes = jnp.dtype(out_dtype).itemsize
    weight_elems = f_pad * h_pad + h_pad * h_pad + h_pad * head_pad
    bias_bytes = (2 * h_pad + head_pad) * 4
    vmem_bytes = (
        2 * tile_b * f_pad * 4                 # x tile, double-buffered (f32)
        + 2 * tile_b * head_pad * out_bytes    # out tile, double-buffered
        + weight_elems * w_bytes               # resident weights
        + bias_bytes
        + 4 * tile_b * h_pad * 4               # f32 intermediates / scratch slack
    )
    vmem_limit = int(min(max(2 * vmem_bytes, 32 << 20), 64 << 20))

    # Advisory cost estimate (helps XLA schedule surrounding tiny ops).
    cost = pl.CostEstimate(
        flops=2 * b_pad * weight_elems,
        transcendentals=0,
        bytes_accessed=(b_pad * f_pad * 4 + weight_elems * w_bytes
                        + bias_bytes + b_pad * head_pad * out_bytes),
    )

    head = pl.pallas_call(
        dueling_kernel,
        out_shape=jax.ShapeDtypeStruct((b_pad, head_pad), out_dtype),
        grid_spec=pltpu.PrefetchScalarGridSpec(
            num_scalar_prefetch=0,
            grid=grid,
            in_specs=[
                pl.BlockSpec((tile_b, f_pad), lambda i: (i, 0)),  # x tile
                _resident_spec((f_pad, h_pad)),                   # w1 (resident)
                _resident_spec((1, h_pad)),                       # b1
                _resident_spec((h_pad, h_pad)),                   # w2
                _resident_spec((1, h_pad)),                       # b2
                _resident_spec((h_pad, head_pad)),                # fused head W
                _resident_spec((1, head_pad)),                    # fused head b
            ],
            out_specs=pl.BlockSpec((tile_b, head_pad), lambda i: (i, 0)),
        ),
        compiler_params=pltpu.CompilerParams(
            dimension_semantics=("parallel",),   # shards batch tiles on v7x's 2 TCs
            vmem_limit_bytes=vmem_limit,
        ),
        cost_estimate=cost,
    )(x, prepared["w1"], prepared["b1"], prepared["w2"], prepared["b2"],
      prepared["wh"], prepared["bh"])

    # Global advantage mean (couples batch rows) is a tiny XLA reduce; doing
    # it here keeps the kernel batch-tileable without changing semantics.
    value = head[:B, 0:1].astype(jnp.float32)             # [B, 1]
    adv = head[:B, 1:1 + n_actions].astype(jnp.float32)   # [B, A]
    return value + (adv - jnp.mean(adv))


# --------------------------------------------------------------------------
# Init (mimics PyTorch U(-1/sqrt(fan_in), 1/sqrt(fan_in))) and reference.
# --------------------------------------------------------------------------
def init_params(key, n_features, n_actions, n_neurons):
    def linear(k, fan_in, fan_out):
        kw, kb = jax.random.split(k)
        bound = 1.0 / jnp.sqrt(float(fan_in))
        w = jax.random.uniform(kw, (fan_in, fan_out), jnp.float32, -bound, bound)
        b = jax.random.uniform(kb, (1, fan_out), jnp.float32, -bound, bound)
        return w, b

    k1, k2, k3, k4 = jax.random.split(key, 4)
    w1, b1 = linear(k1, n_features, n_neurons)
    w2, b2 = linear(k2, n_neurons, n_neurons)
    wv, bv = linear(k3, n_neurons, 1)
    wa, ba = linear(k4, n_neurons, n_actions)
    return dict(w1=w1, b1=b1, w2=w2, b2=b2, wv=wv, bv=bv, wa=wa, ba=ba)


def reference_forward(x, p):
    h1 = jnp.maximum(x @ p["w1"] + p["b1"], 0.0)
    h2 = jnp.maximum(h1 @ p["w2"] + p["b2"], 0.0)
    value = h2 @ p["wv"] + p["bv"]
    adv = h2 @ p["wa"] + p["ba"]
    return value + (adv - jnp.mean(adv))       # global mean, as in the module


if __name__ == "__main__":
    n_features, n_actions, n_neurons = 4, 2, 16   # module defaults
    batch = 8

    key = jax.random.PRNGKey(0)
    kx, kp = jax.random.split(key)
    x = jax.random.normal(kx, (batch, n_features), jnp.float32)
    params = init_params(kp, n_features, n_actions, n_neurons)
    q_ref = reference_forward(x, params)

    # --- strict-accuracy path: f32 MXU operands, f32 output ------------------
    prepared_f32 = prepare_params(params, weights_dtype=jnp.float32)
    q = dueling_forward(x, prepared_f32, n_actions=n_actions)
    q = jax.block_until_ready(q)
    assert q.shape == (batch, n_actions)
    assert jnp.allclose(q, q_ref, atol=1e-4, rtol=1e-4), "f32 mismatch vs reference"

    # --- production path: bf16 weights/activations + bf16 head writeback -----
    prepared_bf16 = prepare_params(params, weights_dtype=jnp.bfloat16)
    q16 = dueling_forward(x, prepared_bf16, n_actions=n_actions,
                          out_dtype=jnp.bfloat16)
    q16 = jax.block_until_ready(q16)
    assert q16.shape == (batch, n_actions)
    assert jnp.allclose(q16, q_ref, atol=5e-2, rtol=5e-2), "bf16 mismatch vs reference"

    print("KERNEL_OK")
</pallas_src>

<mosaic_0001>
module attributes {stable_mosaic.version = 11 : i64} {
  func.func @dueling_kernel(%arg0: i32, %arg1: memref<8x8xf32, #tpu.memory_space<vmem>>, %arg2: memref<8x128xf32, #tpu.memory_space<vmem>>, %arg3: memref<1x128xf32, #tpu.memory_space<vmem>>, %arg4: memref<128x128xf32, #tpu.memory_space<vmem>>, %arg5: memref<1x128xf32, #tpu.memory_space<vmem>>, %arg6: memref<128x128xf32, #tpu.memory_space<vmem>>, %arg7: memref<1x128xf32, #tpu.memory_space<vmem>>, %arg8: memref<8x128xf32, #tpu.memory_space<vmem>>) attributes {dimension_semantics = [#tpu.dimension_semantics<parallel>], iteration_bounds = array<i64: 1>, scalar_prefetch = 0 : i64, scratch_operands = 0 : i64, tpu.core_type = #tpu.core_type<tc>, window_params = [{transform_indices = @transform_0, window_bounds = array<i64: 8, 8>}, {pipeline_mode = #tpu.pipeline_mode<synchronous>, transform_indices = @transform_1, window_bounds = array<i64: 8, 128>}, {pipeline_mode = #tpu.pipeline_mode<synchronous>, transform_indices = @transform_2, window_bounds = array<i64: 1, 128>}, {pipeline_mode = #tpu.pipeline_mode<synchronous>, transform_indices = @transform_3, window_bounds = array<i64: 128, 128>}, {pipeline_mode = #tpu.pipeline_mode<synchronous>, transform_indices = @transform_4, window_bounds = array<i64: 1, 128>}, {pipeline_mode = #tpu.pipeline_mode<synchronous>, transform_indices = @transform_5, window_bounds = array<i64: 128, 128>}, {pipeline_mode = #tpu.pipeline_mode<synchronous>, transform_indices = @transform_6, window_bounds = array<i64: 1, 128>}, {transform_indices = @transform_7, window_bounds = array<i64: 8, 128>}]} {
    %c0 = arith.constant 0 : index
    %c0_0 = arith.constant 0 : index
    %0 = vector.load %arg1[%c0, %c0_0] : memref<8x8xf32, #tpu.memory_space<vmem>>, vector<8x8xf32>
    %c0_1 = arith.constant 0 : index
    %c0_2 = arith.constant 0 : index
    %1 = vector.load %arg2[%c0_1, %c0_2] : memref<8x128xf32, #tpu.memory_space<vmem>>, vector<8x128xf32>
    %cst = arith.constant dense<0.000000e+00> : vector<8x128xf32>
    %2 = tpu.matmul %0, %1, %cst {dimension_numbers = #tpu.dot_dimension_numbers<[1], [0], [0], [1], [0, 0, 1, 1], [], []>} : vector<8x8xf32>, vector<8x128xf32>, vector<8x128xf32> -> vector<8x128xf32>
    %c0_3 = arith.constant 0 : index
    %c0_4 = arith.constant 0 : index
    %3 = vector.load %arg3[%c0_3, %c0_4] : memref<1x128xf32, #tpu.memory_space<vmem>>, vector<1x128xf32>
    %4 = vector.broadcast %3 : vector<1x128xf32> to vector<8x128xf32>
    %5 = arith.addf %2, %4 : vector<8x128xf32>
    %cst_5 = arith.constant 0.000000e+00 : f32
    %6 = vector.broadcast %cst_5 : f32 to vector<8x128xf32>
    %7 = arith.maximumf %5, %6 : vector<8x128xf32>
    %c0_6 = arith.constant 0 : index
    %c0_7 = arith.constant 0 : index
    %8 = vector.load %arg4[%c0_6, %c0_7] : memref<128x128xf32, #tpu.memory_space<vmem>>, vector<128x128xf32>
    %cst_8 = arith.constant dense<0.000000e+00> : vector<8x128xf32>
    %9 = tpu.matmul %7, %8, %cst_8 {dimension_numbers = #tpu.dot_dimension_numbers<[1], [0], [0], [1], [0, 0, 1, 1], [], []>} : vector<8x128xf32>, vector<128x128xf32>, vector<8x128xf32> -> vector<8x128xf32>
    %c0_9 = arith.constant 0 : index
    %c0_10 = arith.constant 0 : index
    %10 = vector.load %arg5[%c0_9, %c0_10] : memref<1x128xf32, #tpu.memory_space<vmem>>, vector<1x128xf32>
    %11 = vector.broadcast %10 : vector<1x128xf32> to vector<8x128xf32>
    %12 = arith.addf %9, %11 : vector<8x128xf32>
    %cst_11 = arith.constant 0.000000e+00 : f32
    %13 = vector.broadcast %cst_11 : f32 to vector<8x128xf32>
    %14 = arith.maximumf %12, %13 : vector<8x128xf32>
    %c0_12 = arith.constant 0 : index
    %c0_13 = arith.constant 0 : index
    %15 = vector.load %arg6[%c0_12, %c0_13] : memref<128x128xf32, #tpu.memory_space<vmem>>, vector<128x128xf32>
    %cst_14 = arith.constant dense<0.000000e+00> : vector<8x128xf32>
    %16 = tpu.matmul %14, %15, %cst_14 {dimension_numbers = #tpu.dot_dimension_numbers<[1], [0], [0], [1], [0, 0, 1, 1], [], []>} : vector<8x128xf32>, vector<128x128xf32>, vector<8x128xf32> -> vector<8x128xf32>
    %c0_15 = arith.constant 0 : index
    %c0_16 = arith.constant 0 : index
    %17 = vector.load %arg7[%c0_15, %c0_16] : memref<1x128xf32, #tpu.memory_space<vmem>>, vector<1x128xf32>
    %18 = vector.broadcast %17 : vector<1x128xf32> to vector<8x128xf32>
    %19 = arith.addf %16, %18 : vector<8x128xf32>
    %c0_17 = arith.constant 0 : index
    %c0_18 = arith.constant 0 : index
    %20 = vector.load %arg8[%c0_17, %c0_18] : memref<8x128xf32, #tpu.memory_space<vmem>>, vector<8x128xf32>
    tpu.vector_store %arg8[%c0_17, %c0_18], %19 {strides = array<i32>} : memref<8x128xf32, #tpu.memory_space<vmem>>, vector<8x128xf32>,
    return
  }
  func.func @transform_0(%arg0: i32) -> (i32, i32) {
    %c0_i32 = arith.constant 0 : i32
    %c0_i32_0 = arith.constant 0 : i32
    return %arg0, %c0_i32 : i32, i32
  }
  func.func @transform_1(%arg0: i32) -> (i32, i32) {
    %c0_i32 = arith.constant 0 : i32
    %c0_i32_0 = arith.constant 0 : i32
    %c0_i32_1 = arith.constant 0 : i32
    return %c0_i32, %c0_i32_0 : i32, i32
  }
  func.func @transform_2(%arg0: i32) -> (i32, i32) {
    %c0_i32 = arith.constant 0 : i32
    %c0_i32_0 = arith.constant 0 : i32
    %c0_i32_1 = arith.constant 0 : i32
    return %c0_i32, %c0_i32_0 : i32, i32
  }
  func.func @transform_3(%arg0: i32) -> (i32, i32) {
    %c0_i32 = arith.constant 0 : i32
    %c0_i32_0 = arith.constant 0 : i32
    %c0_i32_1 = arith.constant 0 : i32
    return %c0_i32, %c0_i32_0 : i32, i32
  }
  func.func @transform_4(%arg0: i32) -> (i32, i32) {
    %c0_i32 = arith.constant 0 : i32
    %c0_i32_0 = arith.constant 0 : i32
    %c0_i32_1 = arith.constant 0 : i32
    return %c0_i32, %c0_i32_0 : i32, i32
  }
  func.func @transform_5(%arg0: i32) -> (i32, i32) {
    %c0_i32 = arith.constant 0 : i32
    %c0_i32_0 = arith.constant 0 : i32
    %c0_i32_1 = arith.constant 0 : i32
    return %c0_i32, %c0_i32_0 : i32, i32
  }
  func.func @transform_6(%arg0: i32) -> (i32, i32) {
    %c0_i32 = arith.constant 0 : i32
    %c0_i32_0 = arith.constant 0 : i32
    %c0_i32_1 = arith.constant 0 : i32
    return %c0_i32, %c0_i32_0 : i32, i32
  }
  func.func @transform_7(%arg0: i32) -> (i32, i32) {
    %c0_i32 = arith.constant 0 : i32
    %c0_i32_0 = arith.constant 0 : i32
    return %arg0, %c0_i32 : i32, i32
  }
}

</mosaic_0001>

<llo_original>
// kernel: dueling_forward.1
$region0: #{dueling_forward.1}
  #allocation0 [shape = 'u32[]', space=smem, size = 0x4, offset = 0x4, fixed_abs, tag = 'smem constant byte address 0x4 - core index']
  #allocation1 [shape = 'u32[144,128]{1,0:T(1,128)}', space=vmem, size = 0x12000, scoped, tag = 'internal scratch']
  %s0 = inlined_call_operand.vmem [shape: f32[8,8], index: 0, kind: input, shape index: {}]
  %s1 = inlined_call_operand.vmem [shape: f32[8,128], index: 1, kind: input, shape index: {}]
  %s2 = inlined_call_operand.vmem [shape: f32[1,128], index: 2, kind: input, shape index: {}]
  %s3 = inlined_call_operand.hbm [shape: f32[128,128], index: 3, kind: input, shape index: {}]
  %s4 = inlined_call_operand.vmem [shape: f32[1,128], index: 4, kind: input, shape index: {}]
  %s5 = inlined_call_operand.hbm [shape: f32[128,128], index: 5, kind: input, shape index: {}]
  %s6 = inlined_call_operand.vmem [shape: f32[1,128], index: 6, kind: input, shape index: {}]
  %s7 = inlined_call_operand.vmem [shape: f32[8,128], index: 7, kind: output, shape index: {}]
  %s8 = sld [smem:[#allocation0]]
  $region46: #{dueling_forward.1} parent=0
    _
  %s10 = ssub.s32 1, %s8
  %s11 = scalar_select 0, %s10, %s8
  $region1: #{dueling_forward.1} parent=0
    #allocation2 [shape = 'u8[65536]{0}', space=vmem, size = 0x10000, scoped, tag = 'input window, operand 3, single buffered']
    #allocation3 [shape = 's32[1]{0}', space=sflag, size = 0x4, scoped, tag = 'scoped memory for dueling_forward.1']
    #allocation4 [shape = 'u8[65536]{0}', space=vmem, size = 0x10000, scoped, tag = 'input window, operand 5, single buffered']
    #allocation5 [shape = 's32[1]{0}', space=sflag, size = 0x4, scoped, tag = 'scoped memory for dueling_forward.1']
    %12 = vsyncpa [#allocation3], 0
    %13 = vsyncpa [#allocation5], 0
    // Predicated region
    $region2: #{dueling_forward.1} parent=1 // pred_check
      _
    $region3: #{dueling_forward.1} parent=1 // pred_check_branch
      %15 = sbr.rel (0) target = $region5
    $region4: #{dueling_forward.1} parent=1 // pred_region
      _
    $region5: #{dueling_forward.1} parent=1 // pred_fallthru
      _
    // Predicated region
    $region6: #{dueling_forward.1} parent=1 // pred_check
      _
    $region7: #{dueling_forward.1} parent=1 // pred_check_branch
      %17 = sbr.rel (0) target = $region9
    $region8: #{dueling_forward.1} parent=1 // pred_region
      _
    $region9: #{dueling_forward.1} parent=1 // pred_fallthru
      _
    // Predicated region
    $region10: #{dueling_forward.1} parent=1 // pred_check
      _
    $region11: #{dueling_forward.1} parent=1 // pred_check_branch
      %19 = sbr.rel (0) target = $region13
    $region12: #{dueling_forward.1} parent=1 // pred_region
      _
    $region13: #{dueling_forward.1} parent=1 // pred_fallthru
      _
    // Predicated region
    $region14: #{dueling_forward.1} parent=1 // pred_check
      _
    $region15: #{dueling_forward.1} parent=1 // pred_check_branch
      %21 = sbr.rel (0) target = $region17
    $region16: #{dueling_forward.1} parent=1 // pred_region
      %s23 = ssub.s32 2048, 2048
      %24 = vsyncadd [#allocation3], %s23
      %s25 = sshll.u32 [#allocation2], 4
      %s26 = int_to_ptr.vmem [resolvable:$true] %s25
      %31 = dma.hbm_to_vmem [thread:$0]  %s3, 2048, %s26, [#allocation3], 128, 128, 8
    $region17: #{dueling_forward.1} parent=1 // pred_fallthru
      _
    // Predicated region
    $region18: #{dueling_forward.1} parent=1 // pred_check
      _
    $region19: #{dueling_forward.1} parent=1 // pred_check_branch
      %33 = sbr.rel (0) target = $region21
    $region20: #{dueling_forward.1} parent=1 // pred_region
      _
    $region21: #{dueling_forward.1} parent=1 // pred_fallthru
      _
    // Predicated region
    $region22: #{dueling_forward.1} parent=1 // pred_check
      _
    $region23: #{dueling_forward.1} parent=1 // pred_check_branch
      %35 = sbr.rel (0) target = $region25
    $region24: #{dueling_forward.1} parent=1 // pred_region
      %s37 = ssub.s32 2048, 2048
      %38 = vsyncadd [#allocation5], %s37
      %s39 = sshll.u32 [#allocation4], 4
      %s40 = int_to_ptr.vmem [resolvable:$true] %s39
      %45 = dma.hbm_to_vmem [thread:$0]  %s5, 2048, %s40, [#allocation5], 128, 128, 8
    $region25: #{dueling_forward.1} parent=1 // pred_fallthru
      _
    // Predicated region
    $region26: #{dueling_forward.1} parent=1 // pred_check
      _
    $region27: #{dueling_forward.1} parent=1 // pred_check_branch
      %47 = sbr.rel (0) target = $region29
    $region28: #{dueling_forward.1} parent=1 // pred_region
      _
    $region29: #{dueling_forward.1} parent=1 // pred_fallthru
      _
    // Predicated region
    $region30: #{dueling_forward.1} parent=1 // pred_check
      _
    $region31: #{dueling_forward.1} parent=1 // pred_check_branch
      %49 = sbr.rel (0) target = $region33
    $region32: #{dueling_forward.1} parent=1 // pred_region
      %50 = dma.done [#allocation3], 2048
    $region33: #{dueling_forward.1} parent=1 // pred_fallthru
      _
    // Predicated region
    $region34: #{dueling_forward.1} parent=1 // pred_check
      _
    $region35: #{dueling_forward.1} parent=1 // pred_check_branch
      %52 = sbr.rel (0) target = $region37
    $region36: #{dueling_forward.1} parent=1 // pred_region
      %53 = dma.done [#allocation5], 2048
    $region37: #{dueling_forward.1} parent=1 // pred_fallthru
      _
    %v54 = vld [vmem:[%s0] sm:$0xff]
    %v55 = vld [vmem:[%s1] sm:$0xff]
    %v56 = vld [vmem:[%s2] sm:$0x1]
    %v58 = vlaneseq
    %v59 = vshrl.u32 %v58, 7
    %v60 = vsub.s32 0, %v59
    %v61 = vrot.slane %v56, %v60
    %vm63 = vcmask 64512
    %v65 = vsel %vm63, %v54, 0
    %67 = vmatprep.subr.mxu0 0.0
    %68 = vmatpush1.msra.mxu0 %v55
    %69 = vmatprep.subr.mxu0 0.0
    %70 = vmatpush1.msra.mxu0 0.0
    %71 = vmatprep.subr.mxu0 0.0
    %72 = vmatpush1.msra.mxu0 0.0
    %73 = vmatprep.subr.mxu0 0.0
    %74 = vmatpush1.msra.mxu0 0.0
    %75 = vmatprep.subr.mxu0 0.0
    %76 = vmatpush1.msra.mxu0 0.0
    %77 = vmatprep.subr.mxu0 0.0
    %78 = vmatpush1.msra.mxu0 0.0
    %79 = vmatprep.subr.mxu0 0.0
    %80 = vmatpush1.msra.mxu0 0.0
    %81 = vmatprep.subr.mxu0 0.0
    %82 = vmatpush1.msra.mxu0 0.0
    %83 = vmatprep.subr.mxu0 0.0
    %84 = vmatpush1.msra.mxu0 0.0
    %85 = vmatprep.subr.mxu0 0.0
    %86 = vmatpush1.msra.mxu0 0.0
    %87 = vmatprep.subr.mxu0 0.0
    %88 = vmatpush1.msra.mxu0 0.0
    %89 = vmatprep.subr.mxu0 0.0
    %90 = vmatpush1.msra.mxu0 0.0
    %91 = vmatprep.subr.mxu0 0.0
    %92 = vmatpush1.msra.mxu0 0.0
    %93 = vmatprep.subr.mxu0 0.0
    %94 = vmatpush1.msra.mxu0 0.0
    %95 = vmatprep.subr.mxu0 0.0
    %96 = vmatpush1.msra.mxu0 0.0
    %97 = vmatprep.subr.mxu0 0.0
    %98 = vmatpush1.msra.mxu0 0.0
    %99 = vmatprep.subr.mxu0 0.0
    %100 = vmatpush1.msra.mxu0 0.0
    %101 = vmatprep.subr.mxu0 0.0
    %102 = vmatpush1.msra.mxu0 0.0
    %103 = vmatprep.subr.mxu0 0.0
    %104 = vmatpush1.msra.mxu0 0.0
    %105 = vmatprep.subr.mxu0 0.0
    %106 = vmatpush1.msra.mxu0 0.0
    %107 = vmatprep.subr.mxu0 0.0
    %108 = vmatpush1.msra.mxu0 0.0
    %109 = vmatprep.subr.mxu0 0.0
    %110 = vmatpush1.msra.mxu0 0.0
    %111 = vmatprep.subr.mxu0 0.0
    %112 = vmatpush1.msra.mxu0 0.0
    %113 = vmatprep.subr.mxu0 0.0
    %114 = vmatpush1.msra.mxu0 0.0
    %115 = vmatprep.subr.mxu0 0.0
    %116 = vmatpush1.msra.mxu0 0.0
    %117 = vmatprep.subr.mxu0 0.0
    %118 = vmatpush1.msra.mxu0 0.0
    %119 = vmatprep.subr.mxu0 0.0
    %120 = vmatpush1.msra.mxu0 0.0
    %121 = vmatprep.subr.mxu0 0.0
    %122 = vmatpush1.msra.mxu0 0.0
    %123 = vmatprep.subr.mxu0 0.0
    %124 = vmatpush1.msra.mxu0 0.0
    %125 = vmatprep.subr.mxu0 0.0
    %126 = vmatpush1.msra.mxu0 0.0
    %127 = vmatprep.subr.mxu0 0.0
    %128 = vmatpush1.msra.mxu0 0.0
    %129 = vmatprep.subr.mxu0 0.0
    %130 = vmatpush1.msra.mxu0 0.0
    %131 = vmatprep.mubr.f32.mxu0 0.0
    %132 = vmatmul.mubr.f32.gmra.mrb[0].mxu0 %v65
    %v133 = vpop.f32.mrb[0].mxu0
    %v134 = vadd.f32 %v61, %v133
    %v135 = vpop.f32.mrb[0].mxu0
    %136 = vdwg.mxu0
    %v137 = vmax.f32 %v134, 0.0
    %v138 = vld [vmem:[#allocation2] sm:$0xff]
    %v139 = vld [vmem:[#allocation2 + $0x8] sm:$0xff]
    %v140 = vld [vmem:[#allocation2 + $0x10] sm:$0xff]
    %v141 = vld [vmem:[#allocation2 + $0x18] sm:$0xff]
    %v142 = vld [vmem:[#allocation2 + $0x20] sm:$0xff]
    %v143 = vld [vmem:[#allocation2 + $0x28] sm:$0xff]
    %v144 = vld [vmem:[#allocation2 + $0x30] sm:$0xff]
    %v145 = vld [vmem:[#allocation2 + $0x38] sm:$0xff]
    %v146 = vld [vmem:[#allocation2 + $0x40] sm:$0xff]
    %v147 = vld [vmem:[#allocation2 + $0x48] sm:$0xff]
    %v148 = vld [vmem:[#allocation2 + $0x50] sm:$0xff]
    %v149 = vld [vmem:[#allocation2 + $0x58] sm:$0xff]
    %v150 = vld [vmem:[#allocation2 + $0x60] sm:$0xff]
    %v151 = vld [vmem:[#allocation2 + $0x68] sm:$0xff]
    %v152 = vld [vmem:[#allocation2 + $0x70] sm:$0xff]
    %v153 = vld [vmem:[#allocation2 + $0x78] sm:$0xff]
    %v154 = vld [vmem:[%s4] sm:$0x1]
    %v156 = vlaneseq
    %v157 = vshrl.u32 %v156, 7
    %v158 = vsub.s32 0, %v157
    %v159 = vrot.slane %v154, %v158
    %161 = vmatprep.subr.mxu0 0.0
    %162 = vmatpush1.msra.mxu0 %v138
    %163 = vmatprep.subr.mxu0 0.0
    %164 = vmatpush1.msra.mxu0 %v139
    %165 = vmatprep.subr.mxu0 0.0
    %166 = vmatpush1.msra.mxu0 %v140
    %167 = vmatprep.subr.mxu0 0.0
    %168 = vmatpush1.msra.mxu0 %v141
    %169 = vmatprep.subr.mxu0 0.0
    %170 = vmatpush1.msra.mxu0 %v142
    %171 = vmatprep.subr.mxu0 0.0
    %172 = vmatpush1.msra.mxu0 %v143
    %173 = vmatprep.subr.mxu0 0.0
    %174 = vmatpush1.msra.mxu0 %v144
    %175 = vmatprep.subr.mxu0 0.0
    %176 = vmatpush1.msra.mxu0 %v145
    %177 = vmatprep.subr.mxu0 0.0
    %178 = vmatpush1.msra.mxu0 %v146
    %179 = vmatprep.subr.mxu0 0.0
    %180 = vmatpush1.msra.mxu0 %v147
    %181 = vmatprep.subr.mxu0 0.0
    %182 = vmatpush1.msra.mxu0 %v148
    %183 = vmatprep.subr.mxu0 0.0
    %184 = vmatpush1.msra.mxu0 %v149
    %185 = vmatprep.subr.mxu0 0.0
    %186 = vmatpush1.msra.mxu0 %v150
    %187 = vmatprep.subr.mxu0 0.0
    %188 = vmatpush1.msra.mxu0 %v151
    %189 = vmatprep.subr.mxu0 0.0
    %190 = vmatpush1.msra.mxu0 %v152
    %191 = vmatprep.subr.mxu0 0.0
    %192 = vmatpush1.msra.mxu0 %v153
    %193 = vmatprep.subr.mxu0 0.0
    %194 = vmatpush1.msra.mxu0 0.0
    %195 = vmatprep.subr.mxu0 0.0
    %196 = vmatpush1.msra.mxu0 0.0
    %197 = vmatprep.subr.mxu0 0.0
    %198 = vmatpush1.msra.mxu0 0.0
    %199 = vmatprep.subr.mxu0 0.0
    %200 = vmatpush1.msra.mxu0 0.0
    %201 = vmatprep.subr.mxu0 0.0
    %202 = vmatpush1.msra.mxu0 0.0
    %203 = vmatprep.subr.mxu0 0.0
    %204 = vmatpush1.msra.mxu0 0.0
    %205 = vmatprep.subr.mxu0 0.0
    %206 = vmatpush1.msra.mxu0 0.0
    %207 = vmatprep.subr.mxu0 0.0
    %208 = vmatpush1.msra.mxu0 0.0
    %209 = vmatprep.subr.mxu0 0.0
    %210 = vmatpush1.msra.mxu0 0.0
    %211 = vmatprep.subr.mxu0 0.0
    %212 = vmatpush1.msra.mxu0 0.0
    %213 = vmatprep.subr.mxu0 0.0
    %214 = vmatpush1.msra.mxu0 0.0
    %215 = vmatprep.subr.mxu0 0.0
    %216 = vmatpush1.msra.mxu0 0.0
    %217 = vmatprep.subr.mxu0 0.0
    %218 = vmatpush1.msra.mxu0 0.0
    %219 = vmatprep.subr.mxu0 0.0
    %220 = vmatpush1.msra.mxu0 0.0
    %221 = vmatprep.subr.mxu0 0.0
    %222 = vmatpush1.msra.mxu0 0.0
    %223 = vmatprep.subr.mxu0 0.0
    %224 = vmatpush1.msra.mxu0 0.0
    %225 = vmatprep.mubr.f32.mxu0 0.0
    %226 = vmatmul.mubr.f32.gmra.mrb[0].mxu0 %v137
    %v227 = vpop.f32.mrb[0].mxu0
    %v228 = vadd.f32 %v159, %v227
    %v229 = vpop.f32.mrb[0].mxu0
    %230 = vdwg.mxu0
    %v231 = vmax.f32 %v228, 0.0
    %v232 = vld [vmem:[#allocation4] sm:$0xff]
    %v233 = vld [vmem:[#allocation4 + $0x8] sm:$0xff]
    %v234 = vld [vmem:[#allocation4 + $0x10] sm:$0xff]
    %v235 = vld [vmem:[#allocation4 + $0x18] sm:$0xff]
    %v236 = vld [vmem:[#allocation4 + $0x20] sm:$0xff]
    %v237 = vld [vmem:[#allocation4 + $0x28] sm:$0xff]
    %v238 = vld [vmem:[#allocation4 + $0x30] sm:$0xff]
    %v239 = vld [vmem:[#allocation4 + $0x38] sm:$0xff]
    %v240 = vld [vmem:[#allocation4 + $0x40] sm:$0xff]
    %v241 = vld [vmem:[#allocation4 + $0x48] sm:$0xff]
    %v242 = vld [vmem:[#allocation4 + $0x50] sm:$0xff]
    %v243 = vld [vmem:[#allocation4 + $0x58] sm:$0xff]
    %v244 = vld [vmem:[#allocation4 + $0x60] sm:$0xff]
    %v245 = vld [vmem:[#allocation4 + $0x68] sm:$0xff]
    %v246 = vld [vmem:[#allocation4 + $0x70] sm:$0xff]
    %v247 = vld [vmem:[#allocation4 + $0x78] sm:$0xff]
    %v248 = vld [vmem:[%s6] sm:$0x1]
    %v250 = vlaneseq
    %v251 = vshrl.u32 %v250, 7
    %v252 = vsub.s32 0, %v251
    %v253 = vrot.slane %v248, %v252
    %255 = vmatprep.subr.mxu0 0.0
    %256 = vmatpush1.msra.mxu0 %v232
    %257 = vmatprep.subr.mxu0 0.0
    %258 = vmatpush1.msra.mxu0 %v233
    %259 = vmatprep.subr.mxu0 0.0
    %260 = vmatpush1.msra.mxu0 %v234
    %261 = vmatprep.subr.mxu0 0.0
    %262 = vmatpush1.msra.mxu0 %v235
    %263 = vmatprep.subr.mxu0 0.0
    %264 = vmatpush1.msra.mxu0 %v236
    %265 = vmatprep.subr.mxu0 0.0
    %266 = vmatpush1.msra.mxu0 %v237
    %267 = vmatprep.subr.mxu0 0.0
    %268 = vmatpush1.msra.mxu0 %v238
    %269 = vmatprep.subr.mxu0 0.0
    %270 = vmatpush1.msra.mxu0 %v239
    %271 = vmatprep.subr.mxu0 0.0
    %272 = vmatpush1.msra.mxu0 %v240
    %273 = vmatprep.subr.mxu0 0.0
    %274 = vmatpush1.msra.mxu0 %v241
    %275 = vmatprep.subr.mxu0 0.0
    %276 = vmatpush1.msra.mxu0 %v242
    %277 = vmatprep.subr.mxu0 0.0
    %278 = vmatpush1.msra.mxu0 %v243
    %279 = vmatprep.subr.mxu0 0.0
    %280 = vmatpush1.msra.mxu0 %v244
    %281 = vmatprep.subr.mxu0 0.0
    %282 = vmatpush1.msra.mxu0 %v245
    %283 = vmatprep.subr.mxu0 0.0
    %284 = vmatpush1.msra.mxu0 %v246
    %285 = vmatprep.subr.mxu0 0.0
    %286 = vmatpush1.msra.mxu0 %v247
    %287 = vmatprep.subr.mxu0 0.0
    %288 = vmatpush1.msra.mxu0 0.0
    %289 = vmatprep.subr.mxu0 0.0
    %290 = vmatpush1.msra.mxu0 0.0
    %291 = vmatprep.subr.mxu0 0.0
    %292 = vmatpush1.msra.mxu0 0.0
    %293 = vmatprep.subr.mxu0 0.0
    %294 = vmatpush1.msra.mxu0 0.0
    %295 = vmatprep.subr.mxu0 0.0
    %296 = vmatpush1.msra.mxu0 0.0
    %297 = vmatprep.subr.mxu0 0.0
    %298 = vmatpush1.msra.mxu0 0.0
    %299 = vmatprep.subr.mxu0 0.0
    %300 = vmatpush1.msra.mxu0 0.0
    %301 = vmatprep.subr.mxu0 0.0
    %302 = vmatpush1.msra.mxu0 0.0
    %303 = vmatprep.subr.mxu0 0.0
    %304 = vmatpush1.msra.mxu0 0.0
    %305 = vmatprep.subr.mxu0 0.0
    %306 = vmatpush1.msra.mxu0 0.0
    %307 = vmatprep.subr.mxu0 0.0
    %308 = vmatpush1.msra.mxu0 0.0
    %309 = vmatprep.subr.mxu0 0.0
    %310 = vmatpush1.msra.mxu0 0.0
    %311 = vmatprep.subr.mxu0 0.0
    %312 = vmatpush1.msra.mxu0 0.0
    %313 = vmatprep.subr.mxu0 0.0
    %314 = vmatpush1.msra.mxu0 0.0
    %315 = vmatprep.subr.mxu0 0.0
    %316 = vmatpush1.msra.mxu0 0.0
    %317 = vmatprep.subr.mxu0 0.0
    %318 = vmatpush1.msra.mxu0 0.0
    %319 = vmatprep.mubr.f32.mxu0 0.0
    %320 = vmatmul.mubr.f32.gmra.mrb[0].mxu0 %v231
    %v321 = vpop.f32.mrb[0].mxu0
    %v322 = vadd.f32 %v253, %v321
    %v323 = vpop.f32.mrb[0].mxu0
    %324 = vdwg.mxu0
    %325 = vst [vmem:[%s7] sm:$0xff] %v322
    // Predicated region
    $region38: #{dueling_forward.1} parent=1 // pred_check
      _
    $region39: #{dueling_forward.1} parent=1 // pred_check_branch
      %327 = sbr.rel (0) target = $region41
    $region40: #{dueling_forward.1} parent=1 // pred_region
      _
    $region41: #{dueling_forward.1} parent=1 // pred_fallthru
      _
    // Predicated region
    $region42: #{dueling_forward.1} parent=1 // pred_check
      _
    $region43: #{dueling_forward.1} parent=1 // pred_check_branch
      %329 = sbr.rel (0) target = $region45
    $region44: #{dueling_forward.1} parent=1 // pred_region
      _
    $region45: #{dueling_forward.1} parent=1 // pred_fallthru
      _
    %330 = vsyncpa [#allocation3], 1
    %331 = vsyncpa [#allocation5], 1

</llo_original>
